<compile_context>
chip_gen: v6e
topology: v6e:2x2x1
jax: 0.10.0
libtpu: 0.0.40
codegen_flags: <defaults>
</compile_context>

<pallas_src>
import math

import jax
import jax.numpy as jnp
import numpy as np
from jax import lax
from jax.experimental import pallas as pl
from jax.experimental.pallas import tpu as pltpu

_BN_EPS = 1e-5


def _mlp_kernel(x_ref,      # VMEM (Tr, K)  input row tile
                w_ref,      # VMEM (K, D)   W^T with BN scale folded in (resident, f32)
                shift_ref,  # VMEM (1, D)   folded BN/bias shift (resident, f32)
                out_ref):   # VMEM (Tr, D)
    x = x_ref[...].astype(jnp.float32)

    # Linear (+ folded BN scale) on the MXU with f32 accumulation.
    y = jnp.dot(x, w_ref[...], preferred_element_type=jnp.float32)   # (Tr, D)

    # Folded BatchNorm shift + Linear bias.
    z = y + shift_ref[...]                                            # (Tr, D)

    # SiLU: z * sigmoid(z)  (logistic goes to the EUP slot -> near free).
    out_ref[...] = (z * lax.logistic(z)).astype(out_ref.dtype)


def _round_up(a, m):
    return (a + m - 1) // m * m


def _choose_tile(R, K, D, in_bytes, out_bytes, tile_rows):
    """Pick the largest row tile (multiple of 8) whose double-buffered working
    set fits a conservative VMEM budget."""
    budget = 24 * 1024 * 1024                     # headroom even on v7x (64 MiB VMEM)
    resident = 2 * (K * D * 4 + D * 4)            # W^T + shift (count 2x: double-buffered)
    tile = min(_round_up(R, 8), _round_up(tile_rows, 8))
    while tile > 8:
        per_tile = 2 * tile * (K * in_bytes + D * out_bytes)   # double-buffered in/out
        if resident + per_tile <= budget:
            break
        tile = _round_up(tile // 2, 8)
    return max(tile, 8)


def mlp_layer(x, w, b, gamma, beta, running_mean, running_var,
              *, eps=_BN_EPS, tile_rows=512):
    """x: (R, in_features); w: (out_features, in_features) (PyTorch Linear layout);
    b / gamma / beta / running_mean / running_var: (out_features,)."""
    R, K = x.shape
    D = w.shape[0]

    # Fold eval-mode BatchNorm and the Linear bias:
    #   ((x@W^T + b) - mean) / sqrt(var+eps) * gamma + beta
    #     = x @ (W^T * scale) + shift
    scale = gamma.astype(jnp.float32) * lax.rsqrt(running_var.astype(jnp.float32) + eps)
    shift = (b.astype(jnp.float32) - running_mean.astype(jnp.float32)) * scale \
        + beta.astype(jnp.float32)
    shift = shift.reshape(1, D)                                       # (1, D)
    w_folded = jnp.asarray(w, jnp.float32).T * scale[None, :]         # (K, D)

    in_bytes = jnp.dtype(x.dtype).itemsize
    out_bytes = in_bytes
    tile = _choose_tile(R, K, D, in_bytes, out_bytes, tile_rows)
    Rp = _round_up(R, tile)
    if Rp != R:
        x = jnp.pad(x, ((0, Rp - R), (0, 0)))
    grid = (Rp // tile,)

    out = pl.pallas_call(
        _mlp_kernel,
        out_shape=jax.ShapeDtypeStruct((Rp, D), x.dtype),
        grid=grid,
        in_specs=[
            pl.BlockSpec((tile, K), lambda i: (i, 0)),   # x row tile (streams)
            pl.BlockSpec((K, D), lambda i: (0, 0)),      # W^T * scale (resident)
            pl.BlockSpec((1, D), lambda i: (0, 0)),      # shift (resident)
        ],
        out_specs=pl.BlockSpec((tile, D), lambda i: (i, 0)),
        compiler_params=pltpu.CompilerParams(
            dimension_semantics=("parallel",)),
        cost_estimate=pl.CostEstimate(
            flops=2 * Rp * K * D,
            transcendentals=Rp * D,
            bytes_accessed=Rp * K * in_bytes + K * D * 4 + D * 4 + Rp * D * out_bytes),
    )(x, w_folded, shift)
    return out[:R]


def _reference(x, w, b, gamma, beta, running_mean, running_var, eps=_BN_EPS):
    y = x.astype(jnp.float32) @ w.T.astype(jnp.float32) + b
    y = (y - running_mean) / jnp.sqrt(running_var + eps) * gamma + beta
    return y * jax.nn.sigmoid(y)


if __name__ == "__main__":
    key = jax.random.PRNGKey(0)
    ks = jax.random.split(key, 6)

    R, K, D = 203, 64, 256         # rows (batch), in_features, out_features
    x = jax.random.normal(ks[0], (R, K), jnp.float32)

    # Deterministic parameter "state" (shapes from nn.Linear(K, D) / nn.BatchNorm1d(D)).
    w = jax.random.normal(ks[1], (D, K), jnp.float32) * (1.0 / math.sqrt(K))
    b = jax.random.normal(ks[2], (D,), jnp.float32) * 0.1
    gamma = 1.0 + 0.1 * jax.random.normal(ks[3], (D,), jnp.float32)
    beta = 0.1 * jax.random.normal(ks[4], (D,), jnp.float32)
    running_mean = 0.1 * jax.random.normal(ks[5], (D,), jnp.float32)
    running_var = jnp.full((D,), 1.5, jnp.float32)

    # TODO(synk): BatchNorm1d in training mode uses batch statistics; this kernel
    # implements the deterministic eval-mode forward with running statistics.
    out = mlp_layer(x, w, b, gamma, beta, running_mean, running_var)
    out = jax.block_until_ready(out)

    ref = _reference(x, w, b, gamma, beta, running_mean, running_var)
    np.testing.assert_allclose(np.asarray(out), np.asarray(ref),
                               rtol=1e-5, atol=1e-5)
    print("KERNEL_OK")
</pallas_src>

<mosaic_0001>
module attributes {stable_mosaic.version = 11 : i64} {
  func.func @_mlp_kernel(%arg0: i32, %arg1: memref<208x64xf32, #tpu.memory_space<vmem>>, %arg2: memref<64x256xf32, #tpu.memory_space<vmem>>, %arg3: memref<1x256xf32, #tpu.memory_space<vmem>>, %arg4: memref<208x256xf32, #tpu.memory_space<vmem>>) attributes {dimension_semantics = [#tpu.dimension_semantics<parallel>], iteration_bounds = array<i64: 1>, scalar_prefetch = 0 : i64, scratch_operands = 0 : i64, tpu.core_type = #tpu.core_type<tc>, window_params = [{transform_indices = @transform_0, window_bounds = array<i64: 208, 64>}, {pipeline_mode = #tpu.pipeline_mode<synchronous>, transform_indices = @transform_1, window_bounds = array<i64: 64, 256>}, {pipeline_mode = #tpu.pipeline_mode<synchronous>, transform_indices = @transform_2, window_bounds = array<i64: 1, 256>}, {transform_indices = @transform_3, window_bounds = array<i64: 208, 256>}]} {
    %c0 = arith.constant 0 : index
    %c0_0 = arith.constant 0 : index
    %0 = vector.load %arg1[%c0, %c0_0] : memref<208x64xf32, #tpu.memory_space<vmem>>, vector<208x64xf32>
    %c0_1 = arith.constant 0 : index
    %c0_2 = arith.constant 0 : index
    %1 = vector.load %arg2[%c0_1, %c0_2] : memref<64x256xf32, #tpu.memory_space<vmem>>, vector<64x256xf32>
    %cst = arith.constant dense<0.000000e+00> : vector<208x256xf32>
    %2 = tpu.matmul %0, %1, %cst {dimension_numbers = #tpu.dot_dimension_numbers<[1], [0], [0], [1], [0, 0, 1, 1], [], []>} : vector<208x64xf32>, vector<64x256xf32>, vector<208x256xf32> -> vector<208x256xf32>
    %c0_3 = arith.constant 0 : index
    %c0_4 = arith.constant 0 : index
    %3 = vector.load %arg3[%c0_3, %c0_4] : memref<1x256xf32, #tpu.memory_space<vmem>>, vector<1x256xf32>
    %4 = vector.broadcast %3 : vector<1x256xf32> to vector<208x256xf32>
    %5 = arith.addf %2, %4 : vector<208x256xf32>
    %6 = arith.negf %5 : vector<208x256xf32>
    %7 = math.exp %6 : vector<208x256xf32>
    %cst_5 = arith.constant 1.000000e+00 : f32
    %8 = vector.broadcast %cst_5 : f32 to vector<208x256xf32>
    %9 = arith.addf %8, %7 : vector<208x256xf32>
    %10 = arith.divf %8, %9 : vector<208x256xf32>
    %11 = arith.mulf %5, %10 : vector<208x256xf32>
    %c0_6 = arith.constant 0 : index
    %c0_7 = arith.constant 0 : index
    %12 = vector.load %arg4[%c0_6, %c0_7] : memref<208x256xf32, #tpu.memory_space<vmem>>, vector<208x256xf32>
    tpu.vector_store %arg4[%c0_6, %c0_7], %11 {strides = array<i32>} : memref<208x256xf32, #tpu.memory_space<vmem>>, vector<208x256xf32>,
    return
  }
  func.func @transform_0(%arg0: i32) -> (i32, i32) {
    %c0_i32 = arith.constant 0 : i32
    %c0_i32_0 = arith.constant 0 : i32
    return %arg0, %c0_i32 : i32, i32
  }
  func.func @transform_1(%arg0: i32) -> (i32, i32) {
    %c0_i32 = arith.constant 0 : i32
    %c0_i32_0 = arith.constant 0 : i32
    %c0_i32_1 = arith.constant 0 : i32
    return %c0_i32, %c0_i32_0 : i32, i32
  }
  func.func @transform_2(%arg0: i32) -> (i32, i32) {
    %c0_i32 = arith.constant 0 : i32
    %c0_i32_0 = arith.constant 0 : i32
    %c0_i32_1 = arith.constant 0 : i32
    return %c0_i32, %c0_i32_0 : i32, i32
  }
  func.func @transform_3(%arg0: i32) -> (i32, i32) {
    %c0_i32 = arith.constant 0 : i32
    %c0_i32_0 = arith.constant 0 : i32
    return %arg0, %c0_i32 : i32, i32
  }
}

</mosaic_0001>

<llo_original>
// kernel: tpu_custom_call.1
$region0: #{tpu_custom_call.1}
  #allocation0 [shape = 'u32[]', space=smem, size = 0x4, offset = 0x4, fixed_abs, tag = 'smem constant byte address 0x4 - core index']
  #allocation1 [shape = 'u32[144,128]{1,0:T(1,128)}', space=vmem, size = 0x12000, scoped, tag = 'internal scratch']
  %s0 = inlined_call_operand.vmem [shape: f32[208,64], index: 0, kind: input, shape index: {}]
  %s1 = inlined_call_operand.vmem [shape: f32[64,256], index: 1, kind: input, shape index: {}]
  %s2 = inlined_call_operand.vmem [shape: f32[1,256], index: 2, kind: input, shape index: {}]
  %s3 = inlined_call_operand.hbm [shape: f32[208,256], index: 3, kind: output, shape index: {}]
  %s4 = sld [smem:[#allocation0]]
  $region22: #{tpu_custom_call.1} parent=0
    _
  %s6 = ssub.s32 1, %s4
  %s7 = scalar_select 0, %s6, %s4
  $region1: #{tpu_custom_call.1} parent=0
    #allocation2 [shape = 'u8[212992]{0}', space=vmem, size = 0x34000, scoped, tag = 'output window, operand 0, single buffered']
    #allocation3 [shape = 's32[1]{0}', space=sflag, size = 0x4, scoped, tag = 'scoped memory for tpu_custom_call.1']
    %8 = vsyncpa [#allocation3], 0
    // Predicated region
    $region2: #{tpu_custom_call.1} parent=1 // pred_check
      _
    $region3: #{tpu_custom_call.1} parent=1 // pred_check_branch
      %10 = sbr.rel (0) target = $region5
    $region4: #{tpu_custom_call.1} parent=1 // pred_region
      _
    $region5: #{tpu_custom_call.1} parent=1 // pred_fallthru
      _
    // Predicated region
    $region6: #{tpu_custom_call.1} parent=1 // pred_check
      _
    $region7: #{tpu_custom_call.1} parent=1 // pred_check_branch
      %12 = sbr.rel (0) target = $region9
    $region8: #{tpu_custom_call.1} parent=1 // pred_region
      _
    $region9: #{tpu_custom_call.1} parent=1 // pred_fallthru
      _
    // Predicated region
    $region10: #{tpu_custom_call.1} parent=1 // pred_check
      _
    $region11: #{tpu_custom_call.1} parent=1 // pred_check_branch
      %14 = sbr.rel (0) target = $region13
    $region12: #{tpu_custom_call.1} parent=1 // pred_region
      _
    $region13: #{tpu_custom_call.1} parent=1 // pred_fallthru
      _
    %v15 = vld [vmem:[%s0] sm:$0xff]
    %v16 = vld [vmem:[%s0 + $0x8] sm:$0xff]
    %v17 = vld [vmem:[%s0 + $0x10] sm:$0xff]
    %v18 = vld [vmem:[%s0 + $0x18] sm:$0xff]
    %v19 = vld [vmem:[%s0 + $0x20] sm:$0xff]
    %v20 = vld [vmem:[%s0 + $0x28] sm:$0xff]
    %v21 = vld [vmem:[%s0 + $0x30] sm:$0xff]
    %v22 = vld [vmem:[%s0 + $0x38] sm:$0xff]
    %v23 = vld [vmem:[%s0 + $0x40] sm:$0xff]
    %v24 = vld [vmem:[%s0 + $0x48] sm:$0xff]
    %v25 = vld [vmem:[%s0 + $0x50] sm:$0xff]
    %v26 = vld [vmem:[%s0 + $0x58] sm:$0xff]
    %v27 = vld [vmem:[%s0 + $0x60] sm:$0xff]
    %v28 = vld [vmem:[%s0 + $0x68] sm:$0xff]
    %v29 = vld [vmem:[%s0 + $0x70] sm:$0xff]
    %v30 = vld [vmem:[%s0 + $0x78] sm:$0xff]
    %v31 = vld [vmem:[%s0 + $0x80] sm:$0xff]
    %v32 = vld [vmem:[%s0 + $0x88] sm:$0xff]
    %v33 = vld [vmem:[%s0 + $0x90] sm:$0xff]
    %v34 = vld [vmem:[%s0 + $0x98] sm:$0xff]
    %v35 = vld [vmem:[%s0 + $0xa0] sm:$0xff]
    %v36 = vld [vmem:[%s0 + $0xa8] sm:$0xff]
    %v37 = vld [vmem:[%s0 + $0xb0] sm:$0xff]
    %v38 = vld [vmem:[%s0 + $0xb8] sm:$0xff]
    %v39 = vld [vmem:[%s0 + $0xc0] sm:$0xff]
    %v40 = vld [vmem:[%s0 + $0xc8] sm:$0xff]
    %v41 = vld [vmem:[%s1] sm:$0xff]
    %v42 = vld [vmem:[%s1 + $0x8] sm:$0xff]
    %v43 = vld [vmem:[%s1 + $0x10] sm:$0xff]
    %v44 = vld [vmem:[%s1 + $0x18] sm:$0xff]
    %v45 = vld [vmem:[%s1 + $0x20] sm:$0xff]
    %v46 = vld [vmem:[%s1 + $0x28] sm:$0xff]
    %v47 = vld [vmem:[%s1 + $0x30] sm:$0xff]
    %v48 = vld [vmem:[%s1 + $0x38] sm:$0xff]
    %v49 = vld [vmem:[%s1 + $0x40] sm:$0xff]
    %v50 = vld [vmem:[%s1 + $0x48] sm:$0xff]
    %v51 = vld [vmem:[%s1 + $0x50] sm:$0xff]
    %v52 = vld [vmem:[%s1 + $0x58] sm:$0xff]
    %v53 = vld [vmem:[%s1 + $0x60] sm:$0xff]
    %v54 = vld [vmem:[%s1 + $0x68] sm:$0xff]
    %v55 = vld [vmem:[%s1 + $0x70] sm:$0xff]
    %v56 = vld [vmem:[%s1 + $0x78] sm:$0xff]
    %v57 = vld [vmem:[%s2] sm:$0x3]
    %v59 = vlaneseq
    %v60 = vshrl.u32 %v59, 7
    %v61 = vsub.s32 0, %v60
    %v62 = vrot.slane %v57, %v61
    %v63 = vlaneseq
    %v64 = vshrl.u32 %v63, 7
    %v65 = vsub.s32 1, %v64
    %v66 = vrot.slane %v57, %v65
    %vm69 = vcmask 523264
    %v71 = vsel %vm69, %v15, 0
    %v74 = vsel %vm69, %v16, 0
    %v77 = vsel %vm69, %v17, 0
    %v80 = vsel %vm69, %v18, 0
    %v83 = vsel %vm69, %v19, 0
    %v86 = vsel %vm69, %v20, 0
    %v89 = vsel %vm69, %v21, 0
    %v92 = vsel %vm69, %v22, 0
    %v95 = vsel %vm69, %v23, 0
    %v98 = vsel %vm69, %v24, 0
    %v101 = vsel %vm69, %v25, 0
    %v104 = vsel %vm69, %v26, 0
    %v107 = vsel %vm69, %v27, 0
    %v110 = vsel %vm69, %v28, 0
    %v113 = vsel %vm69, %v29, 0
    %v116 = vsel %vm69, %v30, 0
    %v119 = vsel %vm69, %v31, 0
    %v122 = vsel %vm69, %v32, 0
    %v125 = vsel %vm69, %v33, 0
    %v128 = vsel %vm69, %v34, 0
    %v131 = vsel %vm69, %v35, 0
    %v134 = vsel %vm69, %v36, 0
    %v137 = vsel %vm69, %v37, 0
    %v140 = vsel %vm69, %v38, 0
    %v143 = vsel %vm69, %v39, 0
    %v146 = vsel %vm69, %v40, 0
    %148 = vmatprep.subr.mxu0 0.0
    %149 = vmatpush1.msra.mxu0 0.0
    %150 = vmatprep.subr.mxu0 0.0
    %151 = vmatpush1.msra.mxu0 0.0
    %152 = vmatprep.subr.mxu0 0.0
    %153 = vmatpush1.msra.mxu0 0.0
    %154 = vmatprep.subr.mxu0 0.0
    %155 = vmatpush1.msra.mxu0 0.0
    %156 = vmatprep.subr.mxu0 0.0
    %157 = vmatpush1.msra.mxu0 0.0
    %158 = vmatprep.subr.mxu0 0.0
    %159 = vmatpush1.msra.mxu0 0.0
    %160 = vmatprep.subr.mxu0 0.0
    %161 = vmatpush1.msra.mxu0 0.0
    %162 = vmatprep.subr.mxu0 0.0
    %163 = vmatpush1.msra.mxu0 0.0
    %164 = vmatprep.subr.mxu0 %v56
    %165 = vmatpush1.msra.mxu0 %v55
    %166 = vmatprep.subr.mxu0 %v54
    %167 = vmatpush1.msra.mxu0 %v53
    %168 = vmatprep.subr.mxu0 %v52
    %169 = vmatpush1.msra.mxu0 %v51
    %170 = vmatprep.subr.mxu0 %v50
    %171 = vmatpush1.msra.mxu0 %v49
    %172 = vmatprep.subr.mxu0 %v48
    %173 = vmatpush1.msra.mxu0 %v47
    %174 = vmatprep.subr.mxu0 %v46
    %175 = vmatpush1.msra.mxu0 %v45
    %176 = vmatprep.subr.mxu0 %v44
    %177 = vmatpush1.msra.mxu0 %v43
    %178 = vmatprep.subr.mxu0 %v42
    %179 = vmatpush1.msra.mxu0 %v41
    %180 = vmatprep.subr.mxu0 0.0
    %181 = vmatpush2.msra.mxu0 0.0
    %182 = vmatprep.subr.mxu0 0.0
    %183 = vmatpush2.msra.mxu0 0.0
    %184 = vmatprep.subr.mxu0 0.0
    %185 = vmatpush2.msra.mxu0 0.0
    %186 = vmatprep.subr.mxu0 0.0
    %187 = vmatpush2.msra.mxu0 0.0
    %188 = vmatprep.subr.mxu0 0.0
    %189 = vmatpush2.msra.mxu0 0.0
    %190 = vmatprep.subr.mxu0 0.0
    %191 = vmatpush2.msra.mxu0 0.0
    %192 = vmatprep.subr.mxu0 0.0
    %193 = vmatpush2.msra.mxu0 0.0
    %194 = vmatprep.subr.mxu0 0.0
    %195 = vmatpush2.msra.mxu0 0.0
    %196 = vmatprep.subr.mxu0 0.0
    %197 = vmatpush2.msra.mxu0 0.0
    %198 = vmatprep.subr.mxu0 0.0
    %199 = vmatpush2.msra.mxu0 0.0
    %200 = vmatprep.subr.mxu0 0.0
    %201 = vmatpush2.msra.mxu0 0.0
    %202 = vmatprep.subr.mxu0 0.0
    %203 = vmatpush2.msra.mxu0 0.0
    %204 = vmatprep.subr.mxu0 0.0
    %205 = vmatpush2.msra.mxu0 0.0
    %206 = vmatprep.subr.mxu0 0.0
    %207 = vmatpush2.msra.mxu0 0.0
    %208 = vmatprep.subr.mxu0 0.0
    %209 = vmatpush2.msra.mxu0 0.0
    %210 = vmatprep.subr.mxu0 0.0
    %211 = vmatpush2.msra.mxu0 0.0
    %212 = vmatprep.mubr.f32.mxu0 0.0
    %213 = vmatmul.mubr.f32.gmra.mxu0 %v71
    %v214 = vpop.f32.mrf.mxu0
    %v215 = vadd.f32 %v62, %v214
    %v216 = vpop.f32.mrf.mxu0
    %v217 = vadd.f32 %v66, %v216
    %218 = vmatprep.mubr.f32.mxu0 0.0
    %219 = vmatmul.mubr.f32.gmra.mxu0 %v74
    %v220 = vpop.f32.mrf.mxu0
    %v221 = vadd.f32 %v62, %v220
    %v222 = vpop.f32.mrf.mxu0
    %v223 = vadd.f32 %v66, %v222
    %224 = vmatprep.mubr.f32.mxu0 0.0
    %225 = vmatmul.mubr.f32.gmra.mxu0 %v77
    %v226 = vpop.f32.mrf.mxu0
    %v227 = vadd.f32 %v62, %v226
    %v228 = vpop.f32.mrf.mxu0
    %v229 = vadd.f32 %v66, %v228
    %230 = vmatprep.mubr.f32.mxu0 0.0
    %231 = vmatmul.mubr.f32.gmra.mxu0 %v80
    %v232 = vpop.f32.mrf.mxu0
    %v233 = vadd.f32 %v62, %v232
    %v234 = vpop.f32.mrf.mxu0
    %v235 = vadd.f32 %v66, %v234
    %236 = vmatprep.mubr.f32.mxu0 0.0
    %237 = vmatmul.mubr.f32.gmra.mxu0 %v83
    %v238 = vpop.f32.mrf.mxu0
    %v239 = vadd.f32 %v62, %v238
    %v240 = vpop.f32.mrf.mxu0
    %v241 = vadd.f32 %v66, %v240
    %242 = vmatprep.mubr.f32.mxu0 0.0
    %243 = vmatmul.mubr.f32.gmra.mxu0 %v86
    %v244 = vpop.f32.mrf.mxu0
    %v245 = vadd.f32 %v62, %v244
    %v246 = vpop.f32.mrf.mxu0
    %v247 = vadd.f32 %v66, %v246
    %248 = vmatprep.mubr.f32.mxu0 0.0
    %249 = vmatmul.mubr.f32.gmra.mxu0 %v89
    %v250 = vpop.f32.mrf.mxu0
    %v251 = vadd.f32 %v62, %v250
    %v252 = vpop.f32.mrf.mxu0
    %v253 = vadd.f32 %v66, %v252
    %254 = vmatprep.mubr.f32.mxu0 0.0
    %255 = vmatmul.mubr.f32.gmra.mxu0 %v92
    %v256 = vpop.f32.mrf.mxu0
    %v257 = vadd.f32 %v62, %v256
    %v258 = vpop.f32.mrf.mxu0
    %v259 = vadd.f32 %v66, %v258
    %260 = vmatprep.mubr.f32.mxu0 0.0
    %261 = vmatmul.mubr.f32.gmra.mxu0 %v95
    %v262 = vpop.f32.mrf.mxu0
    %v263 = vadd.f32 %v62, %v262
    %v264 = vpop.f32.mrf.mxu0
    %v265 = vadd.f32 %v66, %v264
    %266 = vmatprep.mubr.f32.mxu0 0.0
    %267 = vmatmul.mubr.f32.gmra.mxu0 %v98
    %v268 = vpop.f32.mrf.mxu0
    %v269 = vadd.f32 %v62, %v268
    %v270 = vpop.f32.mrf.mxu0
    %v271 = vadd.f32 %v66, %v270
    %272 = vmatprep.mubr.f32.mxu0 0.0
    %273 = vmatmul.mubr.f32.gmra.mxu0 %v101
    %v274 = vpop.f32.mrf.mxu0
    %v275 = vadd.f32 %v62, %v274
    %v276 = vpop.f32.mrf.mxu0
    %v277 = vadd.f32 %v66, %v276
    %278 = vmatprep.mubr.f32.mxu0 0.0
    %279 = vmatmul.mubr.f32.gmra.mxu0 %v104
    %v280 = vpop.f32.mrf.mxu0
    %v281 = vadd.f32 %v62, %v280
    %v282 = vpop.f32.mrf.mxu0
    %v283 = vadd.f32 %v66, %v282
    %284 = vmatprep.mubr.f32.mxu0 0.0
    %285 = vmatmul.mubr.f32.gmra.mxu0 %v107
    %v286 = vpop.f32.mrf.mxu0
    %v287 = vadd.f32 %v62, %v286
    %v288 = vpop.f32.mrf.mxu0
    %v289 = vadd.f32 %v66, %v288
    %290 = vmatprep.mubr.f32.mxu0 0.0
    %291 = vmatmul.mubr.f32.gmra.mxu0 %v110
    %v292 = vpop.f32.mrf.mxu0
    %v293 = vadd.f32 %v62, %v292
    %v294 = vpop.f32.mrf.mxu0
    %v295 = vadd.f32 %v66, %v294
    %296 = vmatprep.mubr.f32.mxu0 0.0
    %297 = vmatmul.mubr.f32.gmra.mxu0 %v113
    %v298 = vpop.f32.mrf.mxu0
    %v299 = vadd.f32 %v62, %v298
    %v300 = vpop.f32.mrf.mxu0
    %v301 = vadd.f32 %v66, %v300
    %302 = vmatprep.mubr.f32.mxu0 0.0
    %303 = vmatmul.mubr.f32.gmra.mxu0 %v116
    %v304 = vpop.f32.mrf.mxu0
    %v305 = vadd.f32 %v62, %v304
    %v306 = vpop.f32.mrf.mxu0
    %v307 = vadd.f32 %v66, %v306
    %308 = vmatprep.mubr.f32.mxu0 0.0
    %309 = vmatmul.mubr.f32.gmra.mxu0 %v119
    %v310 = vpop.f32.mrf.mxu0
    %v311 = vadd.f32 %v62, %v310
    %v312 = vpop.f32.mrf.mxu0
    %v313 = vadd.f32 %v66, %v312
    %314 = vmatprep.mubr.f32.mxu0 0.0
    %315 = vmatmul.mubr.f32.gmra.mxu0 %v122
    %v316 = vpop.f32.mrf.mxu0
    %v317 = vadd.f32 %v62, %v316
    %v318 = vpop.f32.mrf.mxu0
    %v319 = vadd.f32 %v66, %v318
    %320 = vmatprep.mubr.f32.mxu0 0.0
    %321 = vmatmul.mubr.f32.gmra.mxu0 %v125
    %v322 = vpop.f32.mrf.mxu0
    %v323 = vadd.f32 %v62, %v322
    %v324 = vpop.f32.mrf.mxu0
    %v325 = vadd.f32 %v66, %v324
    %326 = vmatprep.mubr.f32.mxu0 0.0
    %327 = vmatmul.mubr.f32.gmra.mxu0 %v128
    %v328 = vpop.f32.mrf.mxu0
    %v329 = vadd.f32 %v62, %v328
    %v330 = vpop.f32.mrf.mxu0
    %v331 = vadd.f32 %v66, %v330
    %332 = vmatprep.mubr.f32.mxu0 0.0
    %333 = vmatmul.mubr.f32.gmra.mxu0 %v131
    %v334 = vpop.f32.mrf.mxu0
    %v335 = vadd.f32 %v62, %v334
    %v336 = vpop.f32.mrf.mxu0
    %v337 = vadd.f32 %v66, %v336
    %338 = vmatprep.mubr.f32.mxu0 0.0
    %339 = vmatmul.mubr.f32.gmra.mxu0 %v134
    %v340 = vpop.f32.mrf.mxu0
    %v341 = vadd.f32 %v62, %v340
    %v342 = vpop.f32.mrf.mxu0
    %v343 = vadd.f32 %v66, %v342
    %344 = vmatprep.mubr.f32.mxu0 0.0
    %345 = vmatmul.mubr.f32.gmra.mxu0 %v137
    %v346 = vpop.f32.mrf.mxu0
    %v347 = vadd.f32 %v62, %v346
    %v348 = vpop.f32.mrf.mxu0
    %v349 = vadd.f32 %v66, %v348
    %350 = vmatprep.mubr.f32.mxu0 0.0
    %351 = vmatmul.mubr.f32.gmra.mxu0 %v140
    %v352 = vpop.f32.mrf.mxu0
    %v353 = vadd.f32 %v62, %v352
    %v354 = vpop.f32.mrf.mxu0
    %v355 = vadd.f32 %v66, %v354
    %356 = vmatprep.mubr.f32.mxu0 0.0
    %357 = vmatmul.mubr.f32.gmra.mxu0 %v143
    %v358 = vpop.f32.mrf.mxu0
    %v359 = vadd.f32 %v62, %v358
    %v360 = vpop.f32.mrf.mxu0
    %v361 = vadd.f32 %v66, %v360
    %362 = vmatprep.mubr.f32.mxu0 0.0
    %363 = vmatmul.mubr.f32.gmra.mxu0 %v146
    %v364 = vpop.f32.mrf.mxu0
    %v365 = vadd.f32 %v62, %v364
    %v366 = vpop.f32.mrf.mxu0
    %v367 = vadd.f32 %v66, %v366
    %368 = vdwg.mxu0
    %v369 = vxor.u32 %v215, 2147483648
    %v370 = vxor.u32 %v217, 2147483648
    %v371 = vxor.u32 %v221, 2147483648
    %v372 = vxor.u32 %v223, 2147483648
    %v373 = vxor.u32 %v227, 2147483648
    %v374 = vxor.u32 %v229, 2147483648
    %v375 = vxor.u32 %v233, 2147483648
    %v376 = vxor.u32 %v235, 2147483648
    %v377 = vxor.u32 %v239, 2147483648
    %v378 = vxor.u32 %v241, 2147483648
    %v379 = vxor.u32 %v245, 2147483648
    %v380 = vxor.u32 %v247, 2147483648
    %v381 = vxor.u32 %v251, 2147483648
    %v382 = vxor.u32 %v253, 2147483648
    %v383 = vxor.u32 %v257, 2147483648
    %v384 = vxor.u32 %v259, 2147483648
    %v385 = vxor.u32 %v263, 2147483648
    %v386 = vxor.u32 %v265, 2147483648
    %v387 = vxor.u32 %v269, 2147483648
    %v388 = vxor.u32 %v271, 2147483648
    %v389 = vxor.u32 %v275, 2147483648
    %v390 = vxor.u32 %v277, 2147483648
    %v391 = vxor.u32 %v281, 2147483648
    %v392 = vxor.u32 %v283, 2147483648
    %v393 = vxor.u32 %v287, 2147483648
    %v394 = vxor.u32 %v289, 2147483648
    %v395 = vxor.u32 %v293, 2147483648
    %v396 = vxor.u32 %v295, 2147483648
    %v397 = vxor.u32 %v299, 2147483648
    %v398 = vxor.u32 %v301, 2147483648
    %v399 = vxor.u32 %v305, 2147483648
    %v400 = vxor.u32 %v307, 2147483648
    %v401 = vxor.u32 %v311, 2147483648
    %v402 = vxor.u32 %v313, 2147483648
    %v403 = vxor.u32 %v317, 2147483648
    %v404 = vxor.u32 %v319, 2147483648
    %v405 = vxor.u32 %v323, 2147483648
    %v406 = vxor.u32 %v325, 2147483648
    %v407 = vxor.u32 %v329, 2147483648
    %v408 = vxor.u32 %v331, 2147483648
    %v409 = vxor.u32 %v335, 2147483648
    %v410 = vxor.u32 %v337, 2147483648
    %v411 = vxor.u32 %v341, 2147483648
    %v412 = vxor.u32 %v343, 2147483648
    %v413 = vxor.u32 %v347, 2147483648
    %v414 = vxor.u32 %v349, 2147483648
    %v415 = vxor.u32 %v353, 2147483648
    %v416 = vxor.u32 %v355, 2147483648
    %v417 = vxor.u32 %v359, 2147483648
    %v418 = vxor.u32 %v361, 2147483648
    %v419 = vxor.u32 %v365, 2147483648
    %v420 = vxor.u32 %v367, 2147483648
    %v421 = vmul.f32 %v369, 1.442695
    %v422 = vpow.pop %v421
    %v423 = vmul.f32 %v370, 1.442695
    %v424 = vpow.pop %v423
    %v425 = vmul.f32 %v371, 1.442695
    %v426 = vpow.pop %v425
    %v427 = vmul.f32 %v372, 1.442695
    %v428 = vpow.pop %v427
    %v429 = vmul.f32 %v373, 1.442695
    %v430 = vpow.pop %v429
    %v431 = vmul.f32 %v374, 1.442695
    %v432 = vpow.pop %v431
    %v433 = vmul.f32 %v375, 1.442695
    %v434 = vpow.pop %v433
    %v435 = vmul.f32 %v376, 1.442695
    %v436 = vpow.pop %v435
    %v437 = vmul.f32 %v377, 1.442695
    %v438 = vpow.pop %v437
    %v439 = vmul.f32 %v378, 1.442695
    %v440 = vpow.pop %v439
    %v441 = vmul.f32 %v379, 1.442695
    %v442 = vpow.pop %v441
    %v443 = vmul.f32 %v380, 1.442695
    %v444 = vpow.pop %v443
    %v445 = vmul.f32 %v381, 1.442695
    %v446 = vpow.pop %v445
    %v447 = vmul.f32 %v382, 1.442695
    %v448 = vpow.pop %v447
    %v449 = vmul.f32 %v383, 1.442695
    %v450 = vpow.pop %v449
    %v451 = vmul.f32 %v384, 1.442695
    %v452 = vpow.pop %v451
    %v453 = vmul.f32 %v385, 1.442695
    %v454 = vpow.pop %v453
    %v455 = vmul.f32 %v386, 1.442695
    %v456 = vpow.pop %v455
    %v457 = vmul.f32 %v387, 1.442695
    %v458 = vpow.pop %v457
    %v459 = vmul.f32 %v388, 1.442695
    %v460 = vpow.pop %v459
    %v461 = vmul.f32 %v389, 1.442695
    %v462 = vpow.pop %v461
    %v463 = vmul.f32 %v390, 1.442695
    %v464 = vpow.pop %v463
    %v465 = vmul.f32 %v391, 1.442695
    %v466 = vpow.pop %v465
    %v467 = vmul.f32 %v392, 1.442695
    %v468 = vpow.pop %v467
    %v469 = vmul.f32 %v393, 1.442695
    %v470 = vpow.pop %v469
    %v471 = vmul.f32 %v394, 1.442695
    %v472 = vpow.pop %v471
    %v473 = vmul.f32 %v395, 1.442695
    %v474 = vpow.pop %v473
    %v475 = vmul.f32 %v396, 1.442695
    %v476 = vpow.pop %v475
    %v477 = vmul.f32 %v397, 1.442695
    %v478 = vpow.pop %v477
    %v479 = vmul.f32 %v398, 1.442695
    %v480 = vpow.pop %v479
    %v481 = vmul.f32 %v399, 1.442695
    %v482 = vpow.pop %v481
    %v483 = vmul.f32 %v400, 1.442695
    %v484 = vpow.pop %v483
    %v485 = vmul.f32 %v401, 1.442695
    %v486 = vpow.pop %v485
    %v487 = vmul.f32 %v402, 1.442695
    %v488 = vpow.pop %v487
    %v489 = vmul.f32 %v403, 1.442695
    %v490 = vpow.pop %v489
    %v491 = vmul.f32 %v404, 1.442695
    %v492 = vpow.pop %v491
    %v493 = vmul.f32 %v405, 1.442695
    %v494 = vpow.pop %v493
    %v495 = vmul.f32 %v406, 1.442695
    %v496 = vpow.pop %v495
    %v497 = vmul.f32 %v407, 1.442695
    %v498 = vpow.pop %v497
    %v499 = vmul.f32 %v408, 1.442695
    %v500 = vpow.pop %v499
    %v501 = vmul.f32 %v409, 1.442695
    %v502 = vpow.pop %v501
    %v503 = vmul.f32 %v410, 1.442695
    %v504 = vpow.pop %v503
    %v505 = vmul.f32 %v411, 1.442695
    %v506 = vpow.pop %v505
    %v507 = vmul.f32 %v412, 1.442695
    %v508 = vpow.pop %v507
    %v509 = vmul.f32 %v413, 1.442695
    %v510 = vpow.pop %v509
    %v511 = vmul.f32 %v414, 1.442695
    %v512 = vpow.pop %v511
    %v513 = vmul.f32 %v415, 1.442695
    %v514 = vpow.pop %v513
    %v515 = vmul.f32 %v416, 1.442695
    %v516 = vpow.pop %v515
    %v517 = vmul.f32 %v417, 1.442695
    %v518 = vpow.pop %v517
    %v519 = vmul.f32 %v418, 1.442695
    %v520 = vpow.pop %v519
    %v521 = vmul.f32 %v419, 1.442695
    %v522 = vpow.pop %v521
    %v523 = vmul.f32 %v420, 1.442695
    %v524 = vpow.pop %v523
    %v525 = vadd.f32 %v422, 1.0
    %v526 = vadd.f32 %v424, 1.0
    %v527 = vadd.f32 %v426, 1.0
    %v528 = vadd.f32 %v428, 1.0
    %v529 = vadd.f32 %v430, 1.0
    %v530 = vadd.f32 %v432, 1.0
    %v531 = vadd.f32 %v434, 1.0
    %v532 = vadd.f32 %v436, 1.0
    %v533 = vadd.f32 %v438, 1.0
    %v534 = vadd.f32 %v440, 1.0
    %v535 = vadd.f32 %v442, 1.0
    %v536 = vadd.f32 %v444, 1.0
    %v537 = vadd.f32 %v446, 1.0
    %v538 = vadd.f32 %v448, 1.0
    %v539 = vadd.f32 %v450, 1.0
    %v540 = vadd.f32 %v452, 1.0
    %v541 = vadd.f32 %v454, 1.0
    %v542 = vadd.f32 %v456, 1.0
    %v543 = vadd.f32 %v458, 1.0
    %v544 = vadd.f32 %v460, 1.0
    %v545 = vadd.f32 %v462, 1.0
    %v546 = vadd.f32 %v464, 1.0
    %v547 = vadd.f32 %v466, 1.0
    %v548 = vadd.f32 %v468, 1.0
    %v549 = vadd.f32 %v470, 1.0
    %v550 = vadd.f32 %v472, 1.0
    %v551 = vadd.f32 %v474, 1.0
    %v552 = vadd.f32 %v476, 1.0
    %v553 = vadd.f32 %v478, 1.0
    %v554 = vadd.f32 %v480, 1.0
    %v555 = vadd.f32 %v482, 1.0
    %v556 = vadd.f32 %v484, 1.0
    %v557 = vadd.f32 %v486, 1.0
    %v558 = vadd.f32 %v488, 1.0
    %v559 = vadd.f32 %v490, 1.0
    %v560 = vadd.f32 %v492, 1.0
    %v561 = vadd.f32 %v494, 1.0
    %v562 = vadd.f32 %v496, 1.0
    %v563 = vadd.f32 %v498, 1.0
    %v564 = vadd.f32 %v500, 1.0
    %v565 = vadd.f32 %v502, 1.0
    %v566 = vadd.f32 %v504, 1.0
    %v567 = vadd.f32 %v506, 1.0
    %v568 = vadd.f32 %v508, 1.0
    %v569 = vadd.f32 %v510, 1.0
    %v570 = vadd.f32 %v512, 1.0
    %v571 = vadd.f32 %v514, 1.0
    %v572 = vadd.f32 %v516, 1.0
    %v573 = vadd.f32 %v518, 1.0
    %v574 = vadd.f32 %v520, 1.0
    %v575 = vadd.f32 %v522, 1.0
    %v576 = vadd.f32 %v524, 1.0
    %v577 = vrcp.pop %v525
    %v578 = vmul.f32 1.0, %v577
    %v579 = vrcp.pop %v526
    %v580 = vmul.f32 1.0, %v579
    %v581 = vrcp.pop %v527
    %v582 = vmul.f32 1.0, %v581
    %v583 = vrcp.pop %v528
    %v584 = vmul.f32 1.0, %v583
    %v585 = vrcp.pop %v529
    %v586 = vmul.f32 1.0, %v585
    %v587 = vrcp.pop %v530
    %v588 = vmul.f32 1.0, %v587
    %v589 = vrcp.pop %v531
    %v590 = vmul.f32 1.0, %v589
    %v591 = vrcp.pop %v532
    %v592 = vmul.f32 1.0, %v591
    %v593 = vrcp.pop %v533
    %v594 = vmul.f32 1.0, %v593
    %v595 = vrcp.pop %v534
    %v596 = vmul.f32 1.0, %v595
    %v597 = vrcp.pop %v535
    %v598 = vmul.f32 1.0, %v597
    %v599 = vrcp.pop %v536
    %v600 = vmul.f32 1.0, %v599
    %v601 = vrcp.pop %v537
    %v602 = vmul.f32 1.0, %v601
    %v603 = vrcp.pop %v538
    %v604 = vmul.f32 1.0, %v603
    %v605 = vrcp.pop %v539
    %v606 = vmul.f32 1.0, %v605
    %v607 = vrcp.pop %v540
    %v608 = vmul.f32 1.0, %v607
    %v609 = vrcp.pop %v541
    %v610 = vmul.f32 1.0, %v609
    %v611 = vrcp.pop %v542
    %v612 = vmul.f32 1.0, %v611
    %v613 = vrcp.pop %v543
    %v614 = vmul.f32 1.0, %v613
    %v615 = vrcp.pop %v544
    %v616 = vmul.f32 1.0, %v615
    %v617 = vrcp.pop %v545
    %v618 = vmul.f32 1.0, %v617
    %v619 = vrcp.pop %v546
    %v620 = vmul.f32 1.0, %v619
    %v621 = vrcp.pop %v547
    %v622 = vmul.f32 1.0, %v621
    %v623 = vrcp.pop %v548
    %v624 = vmul.f32 1.0, %v623
    %v625 = vrcp.pop %v549
    %v626 = vmul.f32 1.0, %v625
    %v627 = vrcp.pop %v550
    %v628 = vmul.f32 1.0, %v627
    %v629 = vrcp.pop %v551
    %v630 = vmul.f32 1.0, %v629
    %v631 = vrcp.pop %v552
    %v632 = vmul.f32 1.0, %v631
    %v633 = vrcp.pop %v553
    %v634 = vmul.f32 1.0, %v633
    %v635 = vrcp.pop %v554
    %v636 = vmul.f32 1.0, %v635
    %v637 = vrcp.pop %v555
    %v638 = vmul.f32 1.0, %v637
    %v639 = vrcp.pop %v556
    %v640 = vmul.f32 1.0, %v639
    %v641 = vrcp.pop %v557
    %v642 = vmul.f32 1.0, %v641
    %v643 = vrcp.pop %v558
    %v644 = vmul.f32 1.0, %v643
    %v645 = vrcp.pop %v559
    %v646 = vmul.f32 1.0, %v645
    %v647 = vrcp.pop %v560
    %v648 = vmul.f32 1.0, %v647
    %v649 = vrcp.pop %v561
    %v650 = vmul.f32 1.0, %v649
    %v651 = vrcp.pop %v562
    %v652 = vmul.f32 1.0, %v651
    %v653 = vrcp.pop %v563
    %v654 = vmul.f32 1.0, %v653
    %v655 = vrcp.pop %v564
    %v656 = vmul.f32 1.0, %v655
    %v657 = vrcp.pop %v565
    %v658 = vmul.f32 1.0, %v657
    %v659 = vrcp.pop %v566
    %v660 = vmul.f32 1.0, %v659
    %v661 = vrcp.pop %v567
    %v662 = vmul.f32 1.0, %v661
    %v663 = vrcp.pop %v568
    %v664 = vmul.f32 1.0, %v663
    %v665 = vrcp.pop %v569
    %v666 = vmul.f32 1.0, %v665
    %v667 = vrcp.pop %v570
    %v668 = vmul.f32 1.0, %v667
    %v669 = vrcp.pop %v571
    %v670 = vmul.f32 1.0, %v669
    %v671 = vrcp.pop %v572
    %v672 = vmul.f32 1.0, %v671
    %v673 = vrcp.pop %v573
    %v674 = vmul.f32 1.0, %v673
    %v675 = vrcp.pop %v574
    %v676 = vmul.f32 1.0, %v675
    %v677 = vrcp.pop %v575
    %v678 = vmul.f32 1.0, %v677
    %v679 = vrcp.pop %v576
    %v680 = vmul.f32 1.0, %v679
    %v681 = vmul.f32 %v215, %v578
    %v682 = vmul.f32 %v217, %v580
    %v683 = vmul.f32 %v221, %v582
    %v684 = vmul.f32 %v223, %v584
    %v685 = vmul.f32 %v227, %v586
    %v686 = vmul.f32 %v229, %v588
    %v687 = vmul.f32 %v233, %v590
    %v688 = vmul.f32 %v235, %v592
    %v689 = vmul.f32 %v239, %v594
    %v690 = vmul.f32 %v241, %v596
    %v691 = vmul.f32 %v245, %v598
    %v692 = vmul.f32 %v247, %v600
    %v693 = vmul.f32 %v251, %v602
    %v694 = vmul.f32 %v253, %v604
    %v695 = vmul.f32 %v257, %v606
    %v696 = vmul.f32 %v259, %v608
    %v697 = vmul.f32 %v263, %v610
    %v698 = vmul.f32 %v265, %v612
    %v699 = vmul.f32 %v269, %v614
    %v700 = vmul.f32 %v271, %v616
    %v701 = vmul.f32 %v275, %v618
    %v702 = vmul.f32 %v277, %v620
    %v703 = vmul.f32 %v281, %v622
    %v704 = vmul.f32 %v283, %v624
    %v705 = vmul.f32 %v287, %v626
    %v706 = vmul.f32 %v289, %v628
    %v707 = vmul.f32 %v293, %v630
    %v708 = vmul.f32 %v295, %v632
    %v709 = vmul.f32 %v299, %v634
    %v710 = vmul.f32 %v301, %v636
    %v711 = vmul.f32 %v305, %v638
    %v712 = vmul.f32 %v307, %v640
    %v713 = vmul.f32 %v311, %v642
    %v714 = vmul.f32 %v313, %v644
    %v715 = vmul.f32 %v317, %v646
    %v716 = vmul.f32 %v319, %v648
    %v717 = vmul.f32 %v323, %v650
    %v718 = vmul.f32 %v325, %v652
    %v719 = vmul.f32 %v329, %v654
    %v720 = vmul.f32 %v331, %v656
    %v721 = vmul.f32 %v335, %v658
    %v722 = vmul.f32 %v337, %v660
    %v723 = vmul.f32 %v341, %v662
    %v724 = vmul.f32 %v343, %v664
    %v725 = vmul.f32 %v347, %v666
    %v726 = vmul.f32 %v349, %v668
    %v727 = vmul.f32 %v353, %v670
    %v728 = vmul.f32 %v355, %v672
    %v729 = vmul.f32 %v359, %v674
    %v730 = vmul.f32 %v361, %v676
    %v731 = vmul.f32 %v365, %v678
    %v732 = vmul.f32 %v367, %v680
    %733 = vst [vmem:[#allocation2] sm:$0xff] %v681
    %734 = vst [vmem:[#allocation2 + $0x8] sm:$0xff] %v682
    %735 = vst [vmem:[#allocation2 + $0x10] sm:$0xff] %v683
    %736 = vst [vmem:[#allocation2 + $0x18] sm:$0xff] %v684
    %737 = vst [vmem:[#allocation2 + $0x20] sm:$0xff] %v685
    %738 = vst [vmem:[#allocation2 + $0x28] sm:$0xff] %v686
    %739 = vst [vmem:[#allocation2 + $0x30] sm:$0xff] %v687
    %740 = vst [vmem:[#allocation2 + $0x38] sm:$0xff] %v688
    %741 = vst [vmem:[#allocation2 + $0x40] sm:$0xff] %v689
    %742 = vst [vmem:[#allocation2 + $0x48] sm:$0xff] %v690
    %743 = vst [vmem:[#allocation2 + $0x50] sm:$0xff] %v691
    %744 = vst [vmem:[#allocation2 + $0x58] sm:$0xff] %v692
    %745 = vst [vmem:[#allocation2 + $0x60] sm:$0xff] %v693
    %746 = vst [vmem:[#allocation2 + $0x68] sm:$0xff] %v694
    %747 = vst [vmem:[#allocation2 + $0x70] sm:$0xff] %v695
    %748 = vst [vmem:[#allocation2 + $0x78] sm:$0xff] %v696
    %749 = vst [vmem:[#allocation2 + $0x80] sm:$0xff] %v697
    %750 = vst [vmem:[#allocation2 + $0x88] sm:$0xff] %v698
    %751 = vst [vmem:[#allocation2 + $0x90] sm:$0xff] %v699
    %752 = vst [vmem:[#allocation2 + $0x98] sm:$0xff] %v700
    %753 = vst [vmem:[#allocation2 + $0xa0] sm:$0xff] %v701
    %754 = vst [vmem:[#allocation2 + $0xa8] sm:$0xff] %v702
    %755 = vst [vmem:[#allocation2 + $0xb0] sm:$0xff] %v703
    %756 = vst [vmem:[#allocation2 + $0xb8] sm:$0xff] %v704
    %757 = vst [vmem:[#allocation2 + $0xc0] sm:$0xff] %v705
    %758 = vst [vmem:[#allocation2 + $0xc8] sm:$0xff] %v706
    %759 = vst [vmem:[#allocation2 + $0xd0] sm:$0xff] %v707
    %760 = vst [vmem:[#allocation2 + $0xd8] sm:$0xff] %v708
    %761 = vst [vmem:[#allocation2 + $0xe0] sm:$0xff] %v709
    %762 = vst [vmem:[#allocation2 + $0xe8] sm:$0xff] %v710
    %763 = vst [vmem:[#allocation2 + $0xf0] sm:$0xff] %v711
    %764 = vst [vmem:[#allocation2 + $0xf8] sm:$0xff] %v712
    %765 = vst [vmem:[#allocation2 + $0x100] sm:$0xff] %v713
    %766 = vst [vmem:[#allocation2 + $0x108] sm:$0xff] %v714
    %767 = vst [vmem:[#allocation2 + $0x110] sm:$0xff] %v715
    %768 = vst [vmem:[#allocation2 + $0x118] sm:$0xff] %v716
    %769 = vst [vmem:[#allocation2 + $0x120] sm:$0xff] %v717
    %770 = vst [vmem:[#allocation2 + $0x128] sm:$0xff] %v718
    %771 = vst [vmem:[#allocation2 + $0x130] sm:$0xff] %v719
    %772 = vst [vmem:[#allocation2 + $0x138] sm:$0xff] %v720
    %773 = vst [vmem:[#allocation2 + $0x140] sm:$0xff] %v721
    %774 = vst [vmem:[#allocation2 + $0x148] sm:$0xff] %v722
    %775 = vst [vmem:[#allocation2 + $0x150] sm:$0xff] %v723
    %776 = vst [vmem:[#allocation2 + $0x158] sm:$0xff] %v724
    %777 = vst [vmem:[#allocation2 + $0x160] sm:$0xff] %v725
    %778 = vst [vmem:[#allocation2 + $0x168] sm:$0xff] %v726
    %779 = vst [vmem:[#allocation2 + $0x170] sm:$0xff] %v727
    %780 = vst [vmem:[#allocation2 + $0x178] sm:$0xff] %v728
    %781 = vst [vmem:[#allocation2 + $0x180] sm:$0xff] %v729
    %782 = vst [vmem:[#allocation2 + $0x188] sm:$0xff] %v730
    %783 = vst [vmem:[#allocation2 + $0x190] sm:$0xff] %v731
    %784 = vst [vmem:[#allocation2 + $0x198] sm:$0xff] %v732
    // Predicated region
    $region14: #{tpu_custom_call.1} parent=1 // pred_check
      _
    $region15: #{tpu_custom_call.1} parent=1 // pred_check_branch
      %786 = sbr.rel (0) target = $region17
    $region16: #{tpu_custom_call.1} parent=1 // pred_region
      %s788 = ssub.s32 6656, 6656
      %789 = vsyncadd [#allocation3], %s788
      %s790 = sshll.u32 [#allocation2], 4
      %s791 = int_to_ptr.vmem [resolvable:$true] %s790
      %796 = dma.vmem_to_hbm [thread:$0]  %s791, 6656, %s3, [#allocation3], 256, 256, 16
    $region17: #{tpu_custom_call.1} parent=1 // pred_fallthru
      _
    // Predicated region
    $region18: #{tpu_custom_call.1} parent=1 // pred_check
      _
    $region19: #{tpu_custom_call.1} parent=1 // pred_check_branch
      %798 = sbr.rel (0) target = $region21
    $region20: #{tpu_custom_call.1} parent=1 // pred_region
      %799 = dma.done [#allocation3], 6656
    $region21: #{tpu_custom_call.1} parent=1 // pred_fallthru
      _
    %800 = vsyncpa [#allocation3], 1

</llo_original>
